<compile_context>
chip_gen: v7x
topology: tpu7x:2x2x1
jax: 0.10.0
libtpu: 0.0.40
codegen_flags: <defaults>
</compile_context>

<pallas_src>
import functools

import jax
import jax.numpy as jnp
import numpy as np
from jax.experimental import pallas as pl
from jax.experimental.pallas import tpu as pltpu


def _build_pe(d_model: int, max_len: int = 5000) -> jnp.ndarray:
    """Deterministic positional-encoding buffer, identical to the PyTorch init."""
    position = np.arange(max_len, dtype=np.float32)[:, None]              # [L, 1]
    div_term = np.exp(np.arange(0, d_model, 2, dtype=np.float32)
                      * (-np.log(10000.0) / d_model))                     # [D/2]
    pe = np.zeros((max_len, 1, d_model), dtype=np.float32)
    pe[:, 0, 0::2] = np.sin(position * div_term)
    pe[:, 0, 1::2] = np.cos(position * div_term)
    return jnp.asarray(pe)


def _pe_add_kernel(x_ref, pe_ref, o_ref):
    # x_ref: [TILE_S, B, D], pe_ref: [TILE_S, 1, D] (broadcast over batch)
    o_ref[...] = (x_ref[...] + pe_ref[...]).astype(o_ref.dtype)


def _pe_add_dropout_kernel(x_ref, pe_ref, u_ref, o_ref, *, keep_prob):
    # u_ref: uniform [0,1) randoms, same block shape as x. Inverted dropout.
    y = x_ref[...] + pe_ref[...]
    keep = u_ref[...] < jnp.float32(keep_prob)
    y = jnp.where(keep, y * (1.0 / keep_prob), jnp.zeros_like(y))
    o_ref[...] = y.astype(o_ref.dtype)


def positional_encoding(x: jnp.ndarray,
                        pe: jnp.ndarray,
                        *,
                        dropout_p: float = 0.1,
                        train: bool = False,
                        rng_key=None,
                        tile_bytes: int = 2 * 1024 * 1024) -> jnp.ndarray:
    """x: [seq_len, batch, d_model]  ->  same shape."""
    S, B, D = x.shape
    if pe.dtype != x.dtype:
        pe = pe.astype(x.dtype)          # keep add in x's dtype (bf16 stays packed)

    # Tile along seq so each buffer is ~tile_bytes; x/out/(mask) double-buffered
    # plus the small pe tile stay far under the 32 MiB scoped VMEM limit.
    itemsize = jnp.dtype(x.dtype).itemsize
    bytes_per_seq_row = B * D * itemsize
    tile_s = int(max(1, min(S, tile_bytes // max(1, bytes_per_seq_row))))
    grid = (pl.cdiv(S, tile_s),)

    x_spec = pl.BlockSpec((tile_s, B, D), lambda i: (i, 0, 0))
    pe_spec = pl.BlockSpec((tile_s, 1, D), lambda i: (i, 0, 0))   # slices full pe buffer
    out_spec = pl.BlockSpec((tile_s, B, D), lambda i: (i, 0, 0))

    compiler_params = pltpu.CompilerParams(
        dimension_semantics=("parallel",),          # shard grid across v7x's 2 TCs
        vmem_limit_bytes=32 * 1024 * 1024,
    )

    use_dropout = train and dropout_p > 0.0
    if use_dropout and dropout_p >= 1.0:
        # Degenerate case: everything is dropped (avoid 1/0 scale).
        return jnp.zeros_like(x)

    if not use_dropout:
        return pl.pallas_call(
            _pe_add_kernel,
            out_shape=jax.ShapeDtypeStruct(x.shape, x.dtype),
            grid=grid,
            in_specs=[x_spec, pe_spec],
            out_specs=out_spec,
            input_output_aliases={0: 0},
            compiler_params=compiler_params,
        )(x, pe)

    keep_prob = 1.0 - float(dropout_p)
    if rng_key is None:
        rng_key = jax.random.PRNGKey(0)
    # NOTE: dropout mask RNG differs from PyTorch's (impossible to match bit-exactly).
    u = jax.random.uniform(rng_key, x.shape, dtype=jnp.float32)
    u_spec = pl.BlockSpec((tile_s, B, D), lambda i: (i, 0, 0))

    kernel = functools.partial(_pe_add_dropout_kernel, keep_prob=keep_prob)
    return pl.pallas_call(
        kernel,
        out_shape=jax.ShapeDtypeStruct(x.shape, x.dtype),
        grid=grid,
        in_specs=[x_spec, pe_spec, u_spec],
        out_specs=out_spec,
        input_output_aliases={0: 0},
        compiler_params=compiler_params,
    )(x, pe, u)


if __name__ == "__main__":
    seq_len, batch, d_model = 8, 2, 32
    key = jax.random.PRNGKey(0)
    k_x, k_drop = jax.random.split(key)
    x = jax.random.normal(k_x, (seq_len, batch, d_model), dtype=jnp.float32)

    pe = _build_pe(d_model, max_len=5000)

    # Reference (pure numpy): x + pe[:S] broadcast over batch.
    ref = np.asarray(x) + np.asarray(pe[:seq_len])

    # Eval-mode forward (dropout identity), matching module.eval() semantics.
    out = positional_encoding(x, pe, dropout_p=0.1, train=False)
    out = jax.block_until_ready(out)
    np.testing.assert_allclose(np.asarray(out), ref, rtol=1e-6, atol=1e-6)

    # Training-mode forward exercises the in-kernel inverted-dropout path.
    dropout_p = 0.1
    keep_prob = 1.0 - dropout_p
    out_train = positional_encoding(x, pe, dropout_p=dropout_p, train=True,
                                    rng_key=k_drop)
    out_train = jax.block_until_ready(out_train)
    assert out_train.shape == x.shape
    out_np = np.asarray(out_train)
    scaled = ref / keep_prob
    ok = (np.isclose(out_np, 0.0, atol=1e-6)
          | np.isclose(out_np, scaled, rtol=1e-5, atol=1e-5))
    assert bool(ok.all()), "dropout output must be 0 or (x+pe)/keep_prob"

    print("KERNEL_OK")
</pallas_src>

<mosaic_0001>
module attributes {stable_mosaic.version = 11 : i64} {
  func.func @_pe_add_kernel(%arg0: i32, %arg1: memref<8x2x32xf32, #tpu.memory_space<vmem>>, %arg2: memref<8x1x32xf32, #tpu.memory_space<vmem>>, %arg3: memref<8x2x32xf32, #tpu.memory_space<vmem>>) attributes {dimension_semantics = [#tpu.dimension_semantics<parallel>], iteration_bounds = array<i64: 1>, scalar_prefetch = 0 : i64, scratch_operands = 0 : i64, tpu.core_type = #tpu.core_type<tc>, window_params = [{transform_indices = @transform_0, window_bounds = array<i64: 8, 2, 32>}, {transform_indices = @transform_1, window_bounds = array<i64: 8, 1, 32>}, {transform_indices = @transform_2, window_bounds = array<i64: 8, 2, 32>}]} {
    %c0 = arith.constant 0 : index
    %c0_0 = arith.constant 0 : index
    %c0_1 = arith.constant 0 : index
    %0 = vector.load %arg1[%c0, %c0_0, %c0_1] : memref<8x2x32xf32, #tpu.memory_space<vmem>>, vector<8x2x32xf32>
    %c0_2 = arith.constant 0 : index
    %c0_3 = arith.constant 0 : index
    %c0_4 = arith.constant 0 : index
    %1 = vector.load %arg2[%c0_2, %c0_3, %c0_4] : memref<8x1x32xf32, #tpu.memory_space<vmem>>, vector<8x1x32xf32>
    %2 = vector.broadcast %1 : vector<8x1x32xf32> to vector<8x2x32xf32>
    %3 = arith.addf %0, %2 : vector<8x2x32xf32>
    %c0_5 = arith.constant 0 : index
    %c0_6 = arith.constant 0 : index
    %c0_7 = arith.constant 0 : index
    %4 = vector.load %arg3[%c0_5, %c0_6, %c0_7] : memref<8x2x32xf32, #tpu.memory_space<vmem>>, vector<8x2x32xf32>
    tpu.vector_store %arg3[%c0_5, %c0_6, %c0_7], %3 {strides = array<i32>} : memref<8x2x32xf32, #tpu.memory_space<vmem>>, vector<8x2x32xf32>,
    return
  }
  func.func @transform_0(%arg0: i32) -> (i32, i32, i32) {
    %c0_i32 = arith.constant 0 : i32
    %c0_i32_0 = arith.constant 0 : i32
    %c0_i32_1 = arith.constant 0 : i32
    return %arg0, %c0_i32, %c0_i32_0 : i32, i32, i32
  }
  func.func @transform_1(%arg0: i32) -> (i32, i32, i32) {
    %c0_i32 = arith.constant 0 : i32
    %c0_i32_0 = arith.constant 0 : i32
    %c0_i32_1 = arith.constant 0 : i32
    return %arg0, %c0_i32, %c0_i32_0 : i32, i32, i32
  }
  func.func @transform_2(%arg0: i32) -> (i32, i32, i32) {
    %c0_i32 = arith.constant 0 : i32
    %c0_i32_0 = arith.constant 0 : i32
    %c0_i32_1 = arith.constant 0 : i32
    return %arg0, %c0_i32, %c0_i32_0 : i32, i32, i32
  }
}

</mosaic_0001>

<llo_original>
// kernel: tpu_custom_call.1
$region0: #{tpu_custom_call.1}
  #allocation0 [shape = 'u32[]', space=smem, size = 0x4, offset = 0x4, fixed_abs, tag = 'smem constant byte address 0x4 - core index']
  #allocation1 [shape = 'u32[144,128]{1,0:T(1,128)}', space=vmem, size = 0x12000, scoped, tag = 'internal scratch']
  %s0 = inlined_call_operand.hbm [shape: f32[8,2,32], index: 0, kind: input, shape index: {}, may-alias: {0,2}]
  %s1 = inlined_call_operand.vmem [shape: f32[5000,1,32], index: 1, kind: input, shape index: {}]
  %s2 = inlined_call_operand.hbm [shape: f32[8,2,32], index: 2, kind: output, shape index: {}, may-alias: {0,2}]
  %s3 = sld [smem:[#allocation0]]
  $region22: #{tpu_custom_call.1} parent=0
    _
  %s5 = ssub.s32 1, %s3
  %s6 = scalar_select 0, %s5, %s3
  $region1: #{tpu_custom_call.1} parent=0
    #allocation2 [shape = 'u8[8192]{0}', space=vmem, size = 0x2000, scoped, tag = 'input window, operand 0, single buffered']
    #allocation3 [shape = 's32[1]{0}', space=sflag, size = 0x4, scoped, tag = 'scoped memory for tpu_custom_call.1']
    #allocation4 [shape = 's32[1]{0}', space=sflag, size = 0x4, scoped, tag = 'scoped memory for tpu_custom_call.1']
    #allocation5 [shape = 'u8[8192]{0}', space=vmem, size = 0x2000, scoped, tag = 'output window, operand 0, single buffered']
    %7 = vsyncpa [#allocation3], 0
    %8 = vsyncpa [#allocation4], 0
    // Predicated region
    $region2: #{tpu_custom_call.1} parent=1 // pred_check
      _
    $region3: #{tpu_custom_call.1} parent=1 // pred_check_branch
      %10 = sbr.rel (0) target = $region5
    $region4: #{tpu_custom_call.1} parent=1 // pred_region
      %s12 = ssub.s32 256, 256
      %13 = vsyncadd [#allocation3], %s12
      %s14 = sshll.u32 [#allocation2], 4
      %s15 = int_to_ptr.vmem [resolvable:$true] %s14
      %20 = dma.hbm_to_vmem [thread:$0]  %s0, 256, %s15, [#allocation3], 32, 32, 2
    $region5: #{tpu_custom_call.1} parent=1 // pred_fallthru
      _
    // Predicated region
    $region6: #{tpu_custom_call.1} parent=1 // pred_check
      _
    $region7: #{tpu_custom_call.1} parent=1 // pred_check_branch
      %22 = sbr.rel (0) target = $region9
    $region8: #{tpu_custom_call.1} parent=1 // pred_region
      _
    $region9: #{tpu_custom_call.1} parent=1 // pred_fallthru
      _
    // Predicated region
    $region10: #{tpu_custom_call.1} parent=1 // pred_check
      _
    $region11: #{tpu_custom_call.1} parent=1 // pred_check_branch
      %24 = sbr.rel (0) target = $region13
    $region12: #{tpu_custom_call.1} parent=1 // pred_region
      %25 = dma.done [#allocation3], 256
    $region13: #{tpu_custom_call.1} parent=1 // pred_fallthru
      _
    %v26 = vld [vmem:[#allocation2] sm:$0x3]
    %v27 = vld [vmem:[#allocation2 + $0x2] sm:$0x3]
    %v28 = vld [vmem:[#allocation2 + $0x4] sm:$0x3]
    %v29 = vld [vmem:[#allocation2 + $0x6] sm:$0x3]
    %v30 = vld [vmem:[#allocation2 + $0x8] sm:$0x3]
    %v31 = vld [vmem:[#allocation2 + $0xa] sm:$0x3]
    %v32 = vld [vmem:[#allocation2 + $0xc] sm:$0x3]
    %v33 = vld [vmem:[#allocation2 + $0xe] sm:$0x3]
    %v34 = vld [vmem:[%s1] sm:$0x1]
    %v35 = vld [vmem:[%s1 + $0x1] sm:$0x1]
    %v36 = vld [vmem:[%s1 + $0x2] sm:$0x1]
    %v37 = vld [vmem:[%s1 + $0x3] sm:$0x1]
    %v38 = vld [vmem:[%s1 + $0x4] sm:$0x1]
    %v39 = vld [vmem:[%s1 + $0x5] sm:$0x1]
    %v40 = vld [vmem:[%s1 + $0x6] sm:$0x1]
    %v41 = vld [vmem:[%s1 + $0x7] sm:$0x1]
    %v50 = vlaneseq
    %v51 = vshrl.u32 %v50, 7
    %v52 = vsub.s32 0, %v51
    %v53 = vrot.slane %v34, %v52
    %v54 = vlaneseq
    %v55 = vshrl.u32 %v54, 7
    %v56 = vsub.s32 0, %v55
    %v57 = vrot.slane %v35, %v56
    %v58 = vlaneseq
    %v59 = vshrl.u32 %v58, 7
    %v60 = vsub.s32 0, %v59
    %v61 = vrot.slane %v36, %v60
    %v62 = vlaneseq
    %v63 = vshrl.u32 %v62, 7
    %v64 = vsub.s32 0, %v63
    %v65 = vrot.slane %v37, %v64
    %v66 = vlaneseq
    %v67 = vshrl.u32 %v66, 7
    %v68 = vsub.s32 0, %v67
    %v69 = vrot.slane %v38, %v68
    %v70 = vlaneseq
    %v71 = vshrl.u32 %v70, 7
    %v72 = vsub.s32 0, %v71
    %v73 = vrot.slane %v39, %v72
    %v74 = vlaneseq
    %v75 = vshrl.u32 %v74, 7
    %v76 = vsub.s32 0, %v75
    %v77 = vrot.slane %v40, %v76
    %v78 = vlaneseq
    %v79 = vshrl.u32 %v78, 7
    %v80 = vsub.s32 0, %v79
    %v81 = vrot.slane %v41, %v80
    %v90 = vadd.f32 %v26, %v53
    %v91 = vadd.f32 %v27, %v57
    %v92 = vadd.f32 %v28, %v61
    %v93 = vadd.f32 %v29, %v65
    %v94 = vadd.f32 %v30, %v69
    %v95 = vadd.f32 %v31, %v73
    %v96 = vadd.f32 %v32, %v77
    %v97 = vadd.f32 %v33, %v81
    %vm98 = vcmask 254976
    %99 = vst.msk [vmem:[#allocation5] sm:$0x3] %vm98, %v90
    %100 = vst.msk [vmem:[#allocation5 + $0x2] sm:$0x3] %vm98, %v91
    %101 = vst.msk [vmem:[#allocation5 + $0x4] sm:$0x3] %vm98, %v92
    %102 = vst.msk [vmem:[#allocation5 + $0x6] sm:$0x3] %vm98, %v93
    %103 = vst.msk [vmem:[#allocation5 + $0x8] sm:$0x3] %vm98, %v94
    %104 = vst.msk [vmem:[#allocation5 + $0xa] sm:$0x3] %vm98, %v95
    %105 = vst.msk [vmem:[#allocation5 + $0xc] sm:$0x3] %vm98, %v96
    %106 = vst.msk [vmem:[#allocation5 + $0xe] sm:$0x3] %vm98, %v97
    // Predicated region
    $region14: #{tpu_custom_call.1} parent=1 // pred_check
      _
    $region15: #{tpu_custom_call.1} parent=1 // pred_check_branch
      %108 = sbr.rel (0) target = $region17
    $region16: #{tpu_custom_call.1} parent=1 // pred_region
      %s110 = ssub.s32 256, 256
      %111 = vsyncadd [#allocation4], %s110
      %s112 = sshll.u32 [#allocation5], 4
      %s113 = int_to_ptr.vmem [resolvable:$true] %s112
      %118 = dma.vmem_to_hbm [thread:$0]  %s113, 256, %s2, [#allocation4], 32, 32, 2
    $region17: #{tpu_custom_call.1} parent=1 // pred_fallthru
      _
    // Predicated region
    $region18: #{tpu_custom_call.1} parent=1 // pred_check
      _
    $region19: #{tpu_custom_call.1} parent=1 // pred_check_branch
      %120 = sbr.rel (0) target = $region21
    $region20: #{tpu_custom_call.1} parent=1 // pred_region
      %121 = dma.done [#allocation4], 256
    $region21: #{tpu_custom_call.1} parent=1 // pred_fallthru
      _
    %122 = vsyncpa [#allocation3], 1
    %123 = vsyncpa [#allocation4], 1

</llo_original>
